<compile_context>
chip_gen: v5e
topology: v5e:2x2
jax: 0.10.0
libtpu: 0.0.40
codegen_flags: <defaults>
</compile_context>

<pallas_src>
import jax
import jax.numpy as jnp
from jax.experimental import pallas as pl
from jax.experimental.pallas import tpu as pltpu


def _round_up(n, m):
    return (n + m - 1) // m * m


def mlp_kernel(x_ref, w0_ref, wh_ref, wl_ref, b_ref, o_ref):
    """x:(TM,K_pad) bf16, w0:(K_pad,H) bf16, wh:(n_mid,H,H) bf16, wl:(H,N_pad) bf16,
    b:(8,N_pad) f32 (row l = bias of layer l), o:(TM,N_pad)."""
    n_mid = wh_ref.shape[0]
    H = wh_ref.shape[1]

    # base_model first Linear (bf16 operands, f32 accumulation)
    h = jnp.dot(x_ref[...], w0_ref[...], preferred_element_type=jnp.float32)
    h = h + b_ref[0:1, :H]

    # middle Linears (base_model 2nd Linear + classification layers), each preceded by ReLU
    for li in range(n_mid):
        h = jnp.maximum(h, 0.0).astype(jnp.bfloat16)
        h = jnp.dot(h, wh_ref[li], preferred_element_type=jnp.float32)
        h = h + b_ref[li + 1:li + 2, :H]

    # output_layer: ReLU -> Linear (output columns padded to 128 lanes, lane-dense store)
    h = jnp.maximum(h, 0.0).astype(jnp.bfloat16)
    out = jnp.dot(h, wl_ref[...], preferred_element_type=jnp.float32)
    out = out + b_ref[n_mid + 1:n_mid + 2, :]
    o_ref[...] = out.astype(o_ref.dtype)


def prepare_params(params):
    """One-time layout prep: pad + bf16-cast weights, pack biases into one slab.
    params: list of (W (in,out) f32, b (1,out) f32).  All middle layers must be (H,H)."""
    n_layers = len(params)
    assert 5 <= n_layers <= 7, "supports HIDDEN of length 4, 5 or 6"
    K, H = params[0][0].shape
    n_out = params[-1][0].shape[1]
    for (w, _) in params[1:-1]:
        assert w.shape == (H, H), "all hidden layers must share the same width"
    assert params[-1][0].shape[0] == H

    K_pad = _round_up(K, 128)                 # 747 -> 768, lane/sublane aligned
    N_pad = _round_up(max(n_out, 128), 128)   # 5   -> 128, lane-dense output store
    assert H <= N_pad and n_layers <= 8

    w0 = (jnp.zeros((K_pad, H), jnp.float32)
          .at[:K, :].set(params[0][0]).astype(jnp.bfloat16))
    wh = jnp.stack([w for (w, _) in params[1:-1]], axis=0).astype(jnp.bfloat16)
    wl = (jnp.zeros((H, N_pad), jnp.float32)
          .at[:, :n_out].set(params[-1][0]).astype(jnp.bfloat16))

    bias = jnp.zeros((8, N_pad), jnp.float32)
    for li, (_, b) in enumerate(params):
        bias = bias.at[li, :b.shape[1]].set(b[0])

    return {"w0": w0, "wh": wh, "wl": wl, "bias": bias,
            "K": K, "H": H, "n_out": n_out, "K_pad": K_pad, "N_pad": N_pad}


def mlp_forward(x, prep):
    """x: [B, initial] float32; prep: output of prepare_params."""
    B, K = x.shape
    assert K == prep["K"]
    K_pad, N_pad, n_out = prep["K_pad"], prep["N_pad"], prep["n_out"]

    # M tile: multiple of 16 (bf16 packing), up to 1024; keep >= 2 grid steps for
    # large batches so v7x's 2 TensorCores both get work.
    B16 = _round_up(B, 16)
    TM = min(1024, B16)
    if B16 >= 512:
        TM = min(TM, _round_up(B16 // 2, 16))
    B_pad = _round_up(B, TM)

    # Per-call work: only pad + bf16-cast x.
    x_p = jnp.zeros((B_pad, K_pad), jnp.bfloat16).at[:B, :K].set(x.astype(jnp.bfloat16))

    # bf16 writeback for large (HBM-bound) batches; f32 for small ones.
    out_dtype = jnp.bfloat16 if B16 >= 512 else jnp.float32

    out = pl.pallas_call(
        mlp_kernel,
        out_shape=jax.ShapeDtypeStruct((B_pad, N_pad), out_dtype),
        grid=(B_pad // TM,),
        in_specs=[
            pl.BlockSpec((TM, K_pad), lambda i: (i, 0)),              # streamed x tile
            pl.BlockSpec(prep["w0"].shape, lambda i: (0, 0)),         # resident weights
            pl.BlockSpec(prep["wh"].shape, lambda i: (0, 0, 0)),
            pl.BlockSpec(prep["wl"].shape, lambda i: (0, 0)),
            pl.BlockSpec(prep["bias"].shape, lambda i: (0, 0)),
        ],
        out_specs=pl.BlockSpec((TM, N_pad), lambda i: (i, 0)),
        compiler_params=pltpu.CompilerParams(
            dimension_semantics=("parallel",)),   # megacore / 2-TC sharding
    )(x_p, prep["w0"], prep["wh"], prep["wl"], prep["bias"])

    return out[:B, :n_out].astype(jnp.float32)


def init_params(key, initial, hidden, n_classes=5):
    """Deterministic init mimicking nn.Linear (uniform +-1/sqrt(fan_in)).
    Weights stored transposed relative to PyTorch: (in, out)."""
    dims = [initial] + list(hidden) + [n_classes]
    params = []
    for i in range(len(dims) - 1):
        fan_in, fan_out = dims[i], dims[i + 1]
        key, kw, kb = jax.random.split(key, 3)
        bound = 1.0 / (fan_in ** 0.5)
        w = jax.random.uniform(kw, (fan_in, fan_out), jnp.float32, -bound, bound)
        b = jax.random.uniform(kb, (1, fan_out), jnp.float32, -bound, bound)
        params.append((w, b))
    return params


def reference_forward(x, params):
    """Pure-JAX reference mirroring the kernel's bf16-operand / f32-accumulate math."""
    q = lambda a: a.astype(jnp.bfloat16).astype(jnp.float32)
    h = q(x)
    for i, (w, b) in enumerate(params):
        if i > 0:
            h = q(jnp.maximum(h, 0.0))
        h = jnp.dot(h, q(w), precision=jax.lax.Precision.HIGHEST) + b
    return h


if __name__ == "__main__":
    # Model(HIDDEN=[32,32,32,32], ONE_HOT=False, DATA_AUG=False, SENTI_ON=True) -> initial=747
    HIDDEN = [32, 32, 32, 32]
    INITIAL = 747
    BATCH = 8

    key = jax.random.PRNGKey(0)
    key, kx = jax.random.split(key)
    x = jax.random.normal(kx, (BATCH, INITIAL), dtype=jnp.float32)
    params = init_params(key, INITIAL, HIDDEN, n_classes=5)

    prep = prepare_params(params)          # one-time weight layout prep (off the hot path)
    out = mlp_forward(x, prep)
    out = jax.block_until_ready(out)

    ref = reference_forward(x, params)
    assert out.shape == (BATCH, 5)
    assert jnp.allclose(out, ref, atol=1e-3, rtol=1e-3), "mismatch vs reference"

    print("KERNEL_OK")
</pallas_src>

<mosaic_0001>
module attributes {stable_mosaic.version = 11 : i64} {
  func.func @mlp_kernel(%arg0: i32, %arg1: memref<16x768xbf16, #tpu.memory_space<vmem>>, %arg2: memref<768x32xbf16, #tpu.memory_space<vmem>>, %arg3: memref<3x32x32xbf16, #tpu.memory_space<vmem>>, %arg4: memref<32x128xbf16, #tpu.memory_space<vmem>>, %arg5: memref<8x128xf32, #tpu.memory_space<vmem>>, %arg6: memref<16x128xf32, #tpu.memory_space<vmem>>) attributes {dimension_semantics = [#tpu.dimension_semantics<parallel>], iteration_bounds = array<i64: 1>, scalar_prefetch = 0 : i64, scratch_operands = 0 : i64, tpu.core_type = #tpu.core_type<tc>, window_params = [{transform_indices = @transform_0, window_bounds = array<i64: 16, 768>}, {pipeline_mode = #tpu.pipeline_mode<synchronous>, transform_indices = @transform_1, window_bounds = array<i64: 768, 32>}, {pipeline_mode = #tpu.pipeline_mode<synchronous>, transform_indices = @transform_2, window_bounds = array<i64: 3, 32, 32>}, {pipeline_mode = #tpu.pipeline_mode<synchronous>, transform_indices = @transform_3, window_bounds = array<i64: 32, 128>}, {pipeline_mode = #tpu.pipeline_mode<synchronous>, transform_indices = @transform_4, window_bounds = array<i64: 8, 128>}, {transform_indices = @transform_5, window_bounds = array<i64: 16, 128>}]} {
    %c0 = arith.constant 0 : index
    %c0_0 = arith.constant 0 : index
    %0 = vector.load %arg1[%c0, %c0_0] : memref<16x768xbf16, #tpu.memory_space<vmem>>, vector<16x768xbf16>
    %c0_1 = arith.constant 0 : index
    %c0_2 = arith.constant 0 : index
    %1 = vector.load %arg2[%c0_1, %c0_2] : memref<768x32xbf16, #tpu.memory_space<vmem>>, vector<768x32xbf16>
    %cst = arith.constant dense<0.000000e+00> : vector<16x32xf32>
    %2 = tpu.matmul %0, %1, %cst {dimension_numbers = #tpu.dot_dimension_numbers<[1], [0], [0], [1], [0, 0, 1, 1], [], []>} : vector<16x768xbf16>, vector<768x32xbf16>, vector<16x32xf32> -> vector<16x32xf32>
    %c0_3 = arith.constant 0 : index
    %c0_4 = arith.constant 0 : index
    %3 = vector.load %arg5[%c0_3, %c0_4] : memref<8x128xf32, #tpu.memory_space<vmem>>, vector<1x32xf32>
    %4 = vector.broadcast %3 : vector<1x32xf32> to vector<16x32xf32>
    %5 = arith.addf %2, %4 : vector<16x32xf32>
    %cst_5 = arith.constant 0.000000e+00 : f32
    %6 = vector.broadcast %cst_5 : f32 to vector<16x32xf32>
    %7 = arith.maximumf %5, %6 : vector<16x32xf32>
    %8 = arith.truncf %7 : vector<16x32xf32> to vector<16x32xbf16>
    %c0_6 = arith.constant 0 : index
    %c0_7 = arith.constant 0 : index
    %c0_8 = arith.constant 0 : index
    %9 = vector.load %arg3[%c0_6, %c0_7, %c0_8] : memref<3x32x32xbf16, #tpu.memory_space<vmem>>, vector<1x32x32xbf16>
    %10 = vector.shape_cast %9 : vector<1x32x32xbf16> to vector<32x32xbf16>
    %cst_9 = arith.constant dense<0.000000e+00> : vector<16x32xf32>
    %11 = tpu.matmul %8, %10, %cst_9 {dimension_numbers = #tpu.dot_dimension_numbers<[1], [0], [0], [1], [0, 0, 1, 1], [], []>} : vector<16x32xbf16>, vector<32x32xbf16>, vector<16x32xf32> -> vector<16x32xf32>
    %c1 = arith.constant 1 : index
    %c0_10 = arith.constant 0 : index
    %12 = vector.load %arg5[%c1, %c0_10] : memref<8x128xf32, #tpu.memory_space<vmem>>, vector<1x32xf32>
    %13 = vector.broadcast %12 : vector<1x32xf32> to vector<16x32xf32>
    %14 = arith.addf %11, %13 : vector<16x32xf32>
    %cst_11 = arith.constant 0.000000e+00 : f32
    %15 = vector.broadcast %cst_11 : f32 to vector<16x32xf32>
    %16 = arith.maximumf %14, %15 : vector<16x32xf32>
    %17 = arith.truncf %16 : vector<16x32xf32> to vector<16x32xbf16>
    %c1_12 = arith.constant 1 : index
    %c0_13 = arith.constant 0 : index
    %c0_14 = arith.constant 0 : index
    %18 = vector.load %arg3[%c1_12, %c0_13, %c0_14] : memref<3x32x32xbf16, #tpu.memory_space<vmem>>, vector<1x32x32xbf16>
    %19 = vector.shape_cast %18 : vector<1x32x32xbf16> to vector<32x32xbf16>
    %cst_15 = arith.constant dense<0.000000e+00> : vector<16x32xf32>
    %20 = tpu.matmul %17, %19, %cst_15 {dimension_numbers = #tpu.dot_dimension_numbers<[1], [0], [0], [1], [0, 0, 1, 1], [], []>} : vector<16x32xbf16>, vector<32x32xbf16>, vector<16x32xf32> -> vector<16x32xf32>
    %c2 = arith.constant 2 : index
    %c0_16 = arith.constant 0 : index
    %21 = vector.load %arg5[%c2, %c0_16] : memref<8x128xf32, #tpu.memory_space<vmem>>, vector<1x32xf32>
    %22 = vector.broadcast %21 : vector<1x32xf32> to vector<16x32xf32>
    %23 = arith.addf %20, %22 : vector<16x32xf32>
    %cst_17 = arith.constant 0.000000e+00 : f32
    %24 = vector.broadcast %cst_17 : f32 to vector<16x32xf32>
    %25 = arith.maximumf %23, %24 : vector<16x32xf32>
    %26 = arith.truncf %25 : vector<16x32xf32> to vector<16x32xbf16>
    %c2_18 = arith.constant 2 : index
    %c0_19 = arith.constant 0 : index
    %c0_20 = arith.constant 0 : index
    %27 = vector.load %arg3[%c2_18, %c0_19, %c0_20] : memref<3x32x32xbf16, #tpu.memory_space<vmem>>, vector<1x32x32xbf16>
    %28 = vector.shape_cast %27 : vector<1x32x32xbf16> to vector<32x32xbf16>
    %cst_21 = arith.constant dense<0.000000e+00> : vector<16x32xf32>
    %29 = tpu.matmul %26, %28, %cst_21 {dimension_numbers = #tpu.dot_dimension_numbers<[1], [0], [0], [1], [0, 0, 1, 1], [], []>} : vector<16x32xbf16>, vector<32x32xbf16>, vector<16x32xf32> -> vector<16x32xf32>
    %c3 = arith.constant 3 : index
    %c0_22 = arith.constant 0 : index
    %30 = vector.load %arg5[%c3, %c0_22] : memref<8x128xf32, #tpu.memory_space<vmem>>, vector<1x32xf32>
    %31 = vector.broadcast %30 : vector<1x32xf32> to vector<16x32xf32>
    %32 = arith.addf %29, %31 : vector<16x32xf32>
    %cst_23 = arith.constant 0.000000e+00 : f32
    %33 = vector.broadcast %cst_23 : f32 to vector<16x32xf32>
    %34 = arith.maximumf %32, %33 : vector<16x32xf32>
    %35 = arith.truncf %34 : vector<16x32xf32> to vector<16x32xbf16>
    %c0_24 = arith.constant 0 : index
    %c0_25 = arith.constant 0 : index
    %36 = vector.load %arg4[%c0_24, %c0_25] : memref<32x128xbf16, #tpu.memory_space<vmem>>, vector<32x128xbf16>
    %cst_26 = arith.constant dense<0.000000e+00> : vector<16x128xf32>
    %37 = tpu.matmul %35, %36, %cst_26 {dimension_numbers = #tpu.dot_dimension_numbers<[1], [0], [0], [1], [0, 0, 1, 1], [], []>} : vector<16x32xbf16>, vector<32x128xbf16>, vector<16x128xf32> -> vector<16x128xf32>
    %c4 = arith.constant 4 : index
    %c0_27 = arith.constant 0 : index
    %38 = vector.load %arg5[%c4, %c0_27] : memref<8x128xf32, #tpu.memory_space<vmem>>, vector<1x128xf32>
    %39 = vector.broadcast %38 : vector<1x128xf32> to vector<16x128xf32>
    %40 = arith.addf %37, %39 : vector<16x128xf32>
    %c0_28 = arith.constant 0 : index
    %c0_29 = arith.constant 0 : index
    %41 = vector.load %arg6[%c0_28, %c0_29] : memref<16x128xf32, #tpu.memory_space<vmem>>, vector<16x128xf32>
    tpu.vector_store %arg6[%c0_28, %c0_29], %40 {strides = array<i32>} : memref<16x128xf32, #tpu.memory_space<vmem>>, vector<16x128xf32>,
    return
  }
  func.func @transform_0(%arg0: i32) -> (i32, i32) {
    %c0_i32 = arith.constant 0 : i32
    %c0_i32_0 = arith.constant 0 : i32
    return %arg0, %c0_i32 : i32, i32
  }
  func.func @transform_1(%arg0: i32) -> (i32, i32) {
    %c0_i32 = arith.constant 0 : i32
    %c0_i32_0 = arith.constant 0 : i32
    %c0_i32_1 = arith.constant 0 : i32
    return %c0_i32, %c0_i32_0 : i32, i32
  }
  func.func @transform_2(%arg0: i32) -> (i32, i32, i32) {
    %c0_i32 = arith.constant 0 : i32
    %c0_i32_0 = arith.constant 0 : i32
    %c0_i32_1 = arith.constant 0 : i32
    %c0_i32_2 = arith.constant 0 : i32
    return %c0_i32, %c0_i32_0, %c0_i32_1 : i32, i32, i32
  }
  func.func @transform_3(%arg0: i32) -> (i32, i32) {
    %c0_i32 = arith.constant 0 : i32
    %c0_i32_0 = arith.constant 0 : i32
    %c0_i32_1 = arith.constant 0 : i32
    return %c0_i32, %c0_i32_0 : i32, i32
  }
  func.func @transform_4(%arg0: i32) -> (i32, i32) {
    %c0_i32 = arith.constant 0 : i32
    %c0_i32_0 = arith.constant 0 : i32
    %c0_i32_1 = arith.constant 0 : i32
    return %c0_i32, %c0_i32_0 : i32, i32
  }
  func.func @transform_5(%arg0: i32) -> (i32, i32) {
    %c0_i32 = arith.constant 0 : i32
    %c0_i32_0 = arith.constant 0 : i32
    return %arg0, %c0_i32 : i32, i32
  }
}

</mosaic_0001>

<llo_original>
// kernel: tpu_custom_call.1
$region0: #{tpu_custom_call.1}
  #allocation0 [shape = 'u32[]', space=smem, size = 0x4, offset = 0x4, fixed_abs, tag = 'smem constant byte address 0x4 - core index']
  #allocation1 [shape = 'u32[72,128]{1,0:T(1,128)}', space=vmem, size = 0x9000, scoped, tag = 'internal scratch']
  %s0 = inlined_call_operand.vmem [shape: bf16[16,768], index: 0, kind: input, shape index: {}]
  %s1 = inlined_call_operand.vmem [shape: bf16[768,32], index: 1, kind: input, shape index: {}]
  %s2 = inlined_call_operand.vmem [shape: bf16[3,32,32], index: 2, kind: input, shape index: {}]
  %s3 = inlined_call_operand.vmem [shape: bf16[32,128], index: 3, kind: input, shape index: {}]
  %s4 = inlined_call_operand.vmem [shape: f32[8,128], index: 4, kind: input, shape index: {}]
  %s5 = inlined_call_operand.hbm [shape: f32[16,128], index: 5, kind: output, shape index: {}]
  %s6 = sld [smem:[#allocation0]]
  $region30: #{tpu_custom_call.1} parent=0
    _
  %s8 = ssub.s32 1, %s6
  %s9 = scalar_select 0, %s8, %s6
  $region1: #{tpu_custom_call.1} parent=0
    #allocation2 [shape = 'u8[8192]{0}', space=vmem, size = 0x2000, scoped, tag = 'output window, operand 0, single buffered']
    #allocation3 [shape = 's32[1]{0}', space=sflag, size = 0x4, scoped, tag = 'scoped memory for tpu_custom_call.1']
    %10 = vsyncpa [#allocation3], 0
    // Predicated region
    $region2: #{tpu_custom_call.1} parent=1 // pred_check
      _
    $region3: #{tpu_custom_call.1} parent=1 // pred_check_branch
      %12 = sbr.rel (0) target = $region5
    $region4: #{tpu_custom_call.1} parent=1 // pred_region
      _
    $region5: #{tpu_custom_call.1} parent=1 // pred_fallthru
      _
    // Predicated region
    $region6: #{tpu_custom_call.1} parent=1 // pred_check
      _
    $region7: #{tpu_custom_call.1} parent=1 // pred_check_branch
      %14 = sbr.rel (0) target = $region9
    $region8: #{tpu_custom_call.1} parent=1 // pred_region
      _
    $region9: #{tpu_custom_call.1} parent=1 // pred_fallthru
      _
    // Predicated region
    $region10: #{tpu_custom_call.1} parent=1 // pred_check
      _
    $region11: #{tpu_custom_call.1} parent=1 // pred_check_branch
      %16 = sbr.rel (0) target = $region13
    $region12: #{tpu_custom_call.1} parent=1 // pred_region
      _
    $region13: #{tpu_custom_call.1} parent=1 // pred_fallthru
      _
    // Predicated region
    $region14: #{tpu_custom_call.1} parent=1 // pred_check
      _
    $region15: #{tpu_custom_call.1} parent=1 // pred_check_branch
      %18 = sbr.rel (0) target = $region17
    $region16: #{tpu_custom_call.1} parent=1 // pred_region
      _
    $region17: #{tpu_custom_call.1} parent=1 // pred_fallthru
      _
    // Predicated region
    $region18: #{tpu_custom_call.1} parent=1 // pred_check
      _
    $region19: #{tpu_custom_call.1} parent=1 // pred_check_branch
      %20 = sbr.rel (0) target = $region21
    $region20: #{tpu_custom_call.1} parent=1 // pred_region
      _
    $region21: #{tpu_custom_call.1} parent=1 // pred_fallthru
      _
    %v22 = vld [vmem:[%s0] sm:$0xff]
    %v23 = vld [vmem:[%s0 + $0x8] sm:$0xff]
    %v24 = vld [vmem:[%s0 + $0x10] sm:$0xff]
    %v25 = vld [vmem:[%s0 + $0x18] sm:$0xff]
    %v26 = vld [vmem:[%s0 + $0x20] sm:$0xff]
    %v27 = vld [vmem:[%s0 + $0x28] sm:$0xff]
    %v28 = vld [vmem:[%s1] sm:$0xf]
    %v29 = vld [vmem:[%s1 + $0x4] sm:$0xf]
    %v30 = vld [vmem:[%s1 + $0x8] sm:$0xf]
    %v31 = vld [vmem:[%s1 + $0xc] sm:$0xf]
    %v32 = vld [vmem:[%s1 + $0x10] sm:$0xf]
    %v33 = vld [vmem:[%s1 + $0x14] sm:$0xf]
    %v34 = vld [vmem:[%s1 + $0x18] sm:$0xf]
    %v35 = vld [vmem:[%s1 + $0x1c] sm:$0xf]
    %v36 = vld [vmem:[%s1 + $0x20] sm:$0xf]
    %v37 = vld [vmem:[%s1 + $0x24] sm:$0xf]
    %v38 = vld [vmem:[%s1 + $0x28] sm:$0xf]
    %v39 = vld [vmem:[%s1 + $0x2c] sm:$0xf]
    %v40 = vld [vmem:[%s1 + $0x30] sm:$0xf]
    %v41 = vld [vmem:[%s1 + $0x34] sm:$0xf]
    %v42 = vld [vmem:[%s1 + $0x38] sm:$0xf]
    %v43 = vld [vmem:[%s1 + $0x3c] sm:$0xf]
    %v44 = vld [vmem:[%s1 + $0x40] sm:$0xf]
    %v45 = vld [vmem:[%s1 + $0x44] sm:$0xf]
    %v46 = vld [vmem:[%s1 + $0x48] sm:$0xf]
    %v47 = vld [vmem:[%s1 + $0x4c] sm:$0xf]
    %v48 = vld [vmem:[%s1 + $0x50] sm:$0xf]
    %v49 = vld [vmem:[%s1 + $0x54] sm:$0xf]
    %v50 = vld [vmem:[%s1 + $0x58] sm:$0xf]
    %v51 = vld [vmem:[%s1 + $0x5c] sm:$0xf]
    %v52 = vld [vmem:[%s1 + $0x60] sm:$0xf]
    %v53 = vld [vmem:[%s1 + $0x64] sm:$0xf]
    %v54 = vld [vmem:[%s1 + $0x68] sm:$0xf]
    %v55 = vld [vmem:[%s1 + $0x6c] sm:$0xf]
    %v56 = vld [vmem:[%s1 + $0x70] sm:$0xf]
    %v57 = vld [vmem:[%s1 + $0x74] sm:$0xf]
    %v58 = vld [vmem:[%s1 + $0x78] sm:$0xf]
    %v59 = vld [vmem:[%s1 + $0x7c] sm:$0xf]
    %v60 = vld [vmem:[%s1 + $0x80] sm:$0xf]
    %v61 = vld [vmem:[%s1 + $0x84] sm:$0xf]
    %v62 = vld [vmem:[%s1 + $0x88] sm:$0xf]
    %v63 = vld [vmem:[%s1 + $0x8c] sm:$0xf]
    %v64 = vld [vmem:[%s1 + $0x90] sm:$0xf]
    %v65 = vld [vmem:[%s1 + $0x94] sm:$0xf]
    %v66 = vld [vmem:[%s1 + $0x98] sm:$0xf]
    %v67 = vld [vmem:[%s1 + $0x9c] sm:$0xf]
    %v68 = vld [vmem:[%s1 + $0xa0] sm:$0xf]
    %v69 = vld [vmem:[%s1 + $0xa4] sm:$0xf]
    %v70 = vld [vmem:[%s1 + $0xa8] sm:$0xf]
    %v71 = vld [vmem:[%s1 + $0xac] sm:$0xf]
    %v72 = vld [vmem:[%s1 + $0xb0] sm:$0xf]
    %v73 = vld [vmem:[%s1 + $0xb4] sm:$0xf]
    %v74 = vld [vmem:[%s1 + $0xb8] sm:$0xf]
    %v75 = vld [vmem:[%s1 + $0xbc] sm:$0xf]
    %v76 = vld [vmem:[%s1 + $0xc0] sm:$0xf]
    %v77 = vld [vmem:[%s1 + $0xc4] sm:$0xf]
    %v78 = vld [vmem:[%s1 + $0xc8] sm:$0xf]
    %v79 = vld [vmem:[%s1 + $0xcc] sm:$0xf]
    %v80 = vld [vmem:[%s1 + $0xd0] sm:$0xf]
    %v81 = vld [vmem:[%s1 + $0xd4] sm:$0xf]
    %v82 = vld [vmem:[%s1 + $0xd8] sm:$0xf]
    %v83 = vld [vmem:[%s1 + $0xdc] sm:$0xf]
    %v84 = vld [vmem:[%s1 + $0xe0] sm:$0xf]
    %v85 = vld [vmem:[%s1 + $0xe4] sm:$0xf]
    %v86 = vld [vmem:[%s1 + $0xe8] sm:$0xf]
    %v87 = vld [vmem:[%s1 + $0xec] sm:$0xf]
    %v88 = vld [vmem:[%s1 + $0xf0] sm:$0xf]
    %v89 = vld [vmem:[%s1 + $0xf4] sm:$0xf]
    %v90 = vld [vmem:[%s1 + $0xf8] sm:$0xf]
    %v91 = vld [vmem:[%s1 + $0xfc] sm:$0xf]
    %v92 = vld [vmem:[%s1 + $0x100] sm:$0xf]
    %v93 = vld [vmem:[%s1 + $0x104] sm:$0xf]
    %v94 = vld [vmem:[%s1 + $0x108] sm:$0xf]
    %v95 = vld [vmem:[%s1 + $0x10c] sm:$0xf]
    %v96 = vld [vmem:[%s1 + $0x110] sm:$0xf]
    %v97 = vld [vmem:[%s1 + $0x114] sm:$0xf]
    %v98 = vld [vmem:[%s1 + $0x118] sm:$0xf]
    %v99 = vld [vmem:[%s1 + $0x11c] sm:$0xf]
    %v100 = vld [vmem:[%s1 + $0x120] sm:$0xf]
    %v101 = vld [vmem:[%s1 + $0x124] sm:$0xf]
    %v102 = vld [vmem:[%s1 + $0x128] sm:$0xf]
    %v103 = vld [vmem:[%s1 + $0x12c] sm:$0xf]
    %v104 = vld [vmem:[%s1 + $0x130] sm:$0xf]
    %v105 = vld [vmem:[%s1 + $0x134] sm:$0xf]
    %v106 = vld [vmem:[%s1 + $0x138] sm:$0xf]
    %v107 = vld [vmem:[%s1 + $0x13c] sm:$0xf]
    %v108 = vld [vmem:[%s1 + $0x140] sm:$0xf]
    %v109 = vld [vmem:[%s1 + $0x144] sm:$0xf]
    %v110 = vld [vmem:[%s1 + $0x148] sm:$0xf]
    %v111 = vld [vmem:[%s1 + $0x14c] sm:$0xf]
    %v112 = vld [vmem:[%s1 + $0x150] sm:$0xf]
    %v113 = vld [vmem:[%s1 + $0x154] sm:$0xf]
    %v114 = vld [vmem:[%s1 + $0x158] sm:$0xf]
    %v115 = vld [vmem:[%s1 + $0x15c] sm:$0xf]
    %v116 = vld [vmem:[%s1 + $0x160] sm:$0xf]
    %v117 = vld [vmem:[%s1 + $0x164] sm:$0xf]
    %v118 = vld [vmem:[%s1 + $0x168] sm:$0xf]
    %v119 = vld [vmem:[%s1 + $0x16c] sm:$0xf]
    %v120 = vld [vmem:[%s1 + $0x170] sm:$0xf]
    %v121 = vld [vmem:[%s1 + $0x174] sm:$0xf]
    %v122 = vld [vmem:[%s1 + $0x178] sm:$0xf]
    %v123 = vld [vmem:[%s1 + $0x17c] sm:$0xf]
    %v124 = vld [vmem:[%s4] sm:$0x1]
    %v125 = vperm.slane %v124, 0
    %v132 = vunpack.c.l.b16 %v22
    %v133 = vunpack.c.h.b16 %v22
    %v134 = vunpack.c.l.b16 %v23
    %v135 = vunpack.c.h.b16 %v23
    %v136 = vunpack.c.l.b16 %v24
    %v137 = vunpack.c.h.b16 %v24
    %v138 = vunpack.c.l.b16 %v25
    %v139 = vunpack.c.h.b16 %v25
    %v140 = vunpack.c.l.b16 %v26
    %v141 = vunpack.c.h.b16 %v26
    %v142 = vunpack.c.l.b16 %v27
    %v143 = vunpack.c.h.b16 %v27
    %v144 = vpack.c.b16 %v138, %v132
    %v145 = vpack.c.b16 %v139, %v133
    %v146 = vpack.c.b16 %v140, %v134
    %v147 = vpack.c.b16 %v141, %v135
    %v148 = vpack.c.b16 %v142, %v136
    %v149 = vpack.c.b16 %v143, %v137
    %v252 = vunpack.c.l.b16 %v28
    %v253 = vunpack.c.l.b16 %v29
    %v254 = vunpack.c.l.b16 %v30
    %v255 = vunpack.c.l.b16 %v31
    %v256 = vunpack.c.l.b16 %v32
    %v257 = vunpack.c.l.b16 %v33
    %v258 = vunpack.c.l.b16 %v34
    %v259 = vunpack.c.l.b16 %v35
    %v260 = vunpack.c.l.b16 %v36
    %v261 = vunpack.c.l.b16 %v37
    %v262 = vunpack.c.l.b16 %v38
    %v263 = vunpack.c.l.b16 %v39
    %v264 = vunpack.c.l.b16 %v40
    %v265 = vunpack.c.l.b16 %v41
    %v266 = vunpack.c.l.b16 %v42
    %v267 = vunpack.c.l.b16 %v43
    %v268 = vunpack.c.l.b16 %v44
    %v269 = vunpack.c.l.b16 %v45
    %v270 = vunpack.c.l.b16 %v46
    %v271 = vunpack.c.l.b16 %v47
    %v272 = vunpack.c.l.b16 %v48
    %v273 = vunpack.c.l.b16 %v49
    %v274 = vunpack.c.l.b16 %v50
    %v275 = vunpack.c.l.b16 %v51
    %v276 = vunpack.c.l.b16 %v52
    %v277 = vunpack.c.l.b16 %v53
    %v278 = vunpack.c.l.b16 %v54
    %v279 = vunpack.c.l.b16 %v55
    %v280 = vunpack.c.l.b16 %v56
    %v281 = vunpack.c.l.b16 %v57
    %v282 = vunpack.c.l.b16 %v58
    %v283 = vunpack.c.l.b16 %v59
    %v284 = vunpack.c.l.b16 %v60
    %v285 = vunpack.c.l.b16 %v61
    %v286 = vunpack.c.l.b16 %v62
    %v287 = vunpack.c.l.b16 %v63
    %v288 = vunpack.c.l.b16 %v64
    %v289 = vunpack.c.l.b16 %v65
    %v290 = vunpack.c.l.b16 %v66
    %v291 = vunpack.c.l.b16 %v67
    %v292 = vunpack.c.l.b16 %v68
    %v293 = vunpack.c.l.b16 %v69
    %v294 = vunpack.c.l.b16 %v70
    %v295 = vunpack.c.l.b16 %v71
    %v296 = vunpack.c.l.b16 %v72
    %v297 = vunpack.c.l.b16 %v73
    %v298 = vunpack.c.l.b16 %v74
    %v299 = vunpack.c.l.b16 %v75
    %v300 = vunpack.c.l.b16 %v76
    %v301 = vunpack.c.l.b16 %v77
    %v302 = vunpack.c.l.b16 %v78
    %v303 = vunpack.c.l.b16 %v79
    %v304 = vunpack.c.l.b16 %v80
    %v305 = vunpack.c.l.b16 %v81
    %v306 = vunpack.c.l.b16 %v82
    %v307 = vunpack.c.l.b16 %v83
    %v308 = vunpack.c.l.b16 %v84
    %v309 = vunpack.c.l.b16 %v85
    %v310 = vunpack.c.l.b16 %v86
    %v311 = vunpack.c.l.b16 %v87
    %v312 = vunpack.c.l.b16 %v88
    %v313 = vunpack.c.l.b16 %v89
    %v314 = vunpack.c.l.b16 %v90
    %v315 = vunpack.c.l.b16 %v91
    %v316 = vunpack.c.l.b16 %v92
    %v317 = vunpack.c.l.b16 %v93
    %v318 = vunpack.c.l.b16 %v94
    %v319 = vunpack.c.l.b16 %v95
    %v320 = vunpack.c.l.b16 %v96
    %v321 = vunpack.c.l.b16 %v97
    %v322 = vunpack.c.l.b16 %v98
    %v323 = vunpack.c.l.b16 %v99
    %v324 = vunpack.c.l.b16 %v100
    %v325 = vunpack.c.l.b16 %v101
    %v326 = vunpack.c.l.b16 %v102
    %v327 = vunpack.c.l.b16 %v103
    %v328 = vunpack.c.l.b16 %v104
    %v329 = vunpack.c.l.b16 %v105
    %v330 = vunpack.c.l.b16 %v106
    %v331 = vunpack.c.l.b16 %v107
    %v332 = vunpack.c.l.b16 %v108
    %v333 = vunpack.c.l.b16 %v109
    %v334 = vunpack.c.l.b16 %v110
    %v335 = vunpack.c.l.b16 %v111
    %v336 = vunpack.c.l.b16 %v112
    %v337 = vunpack.c.l.b16 %v113
    %v338 = vunpack.c.l.b16 %v114
    %v339 = vunpack.c.l.b16 %v115
    %v340 = vunpack.c.l.b16 %v116
    %v341 = vunpack.c.l.b16 %v117
    %v342 = vunpack.c.l.b16 %v118
    %v343 = vunpack.c.l.b16 %v119
    %v344 = vunpack.c.l.b16 %v120
    %v345 = vunpack.c.l.b16 %v121
    %v346 = vunpack.c.l.b16 %v122
    %v347 = vunpack.c.l.b16 %v123
    %v348 = vpack.c.b16 %v253, %v252
    %v349 = vpack.c.b16 %v255, %v254
    %v350 = vpack.c.b16 %v257, %v256
    %v351 = vpack.c.b16 %v259, %v258
    %v352 = vpack.c.b16 %v261, %v260
    %v353 = vpack.c.b16 %v263, %v262
    %v354 = vpack.c.b16 %v265, %v264
    %v355 = vpack.c.b16 %v267, %v266
    %v356 = vpack.c.b16 %v269, %v268
    %v357 = vpack.c.b16 %v271, %v270
    %v358 = vpack.c.b16 %v273, %v272
    %v359 = vpack.c.b16 %v275, %v274
    %v360 = vpack.c.b16 %v277, %v276
    %v361 = vpack.c.b16 %v279, %v278
    %v362 = vpack.c.b16 %v281, %v280
    %v363 = vpack.c.b16 %v283, %v282
    %v364 = vpack.c.b16 %v285, %v284
    %v365 = vpack.c.b16 %v287, %v286
    %v366 = vpack.c.b16 %v289, %v288
    %v367 = vpack.c.b16 %v291, %v290
    %v368 = vpack.c.b16 %v293, %v292
    %v369 = vpack.c.b16 %v295, %v294
    %v370 = vpack.c.b16 %v297, %v296
    %v371 = vpack.c.b16 %v299, %v298
    %v372 = vpack.c.b16 %v301, %v300
    %v373 = vpack.c.b16 %v303, %v302
    %v374 = vpack.c.b16 %v305, %v304
    %v375 = vpack.c.b16 %v307, %v306
    %v376 = vpack.c.b16 %v309, %v308
    %v377 = vpack.c.b16 %v311, %v310
    %v378 = vpack.c.b16 %v313, %v312
    %v379 = vpack.c.b16 %v315, %v314
    %v380 = vpack.c.b16 %v317, %v316
    %v381 = vpack.c.b16 %v319, %v318
    %v382 = vpack.c.b16 %v321, %v320
    %v383 = vpack.c.b16 %v323, %v322
    %v384 = vpack.c.b16 %v325, %v324
    %v385 = vpack.c.b16 %v327, %v326
    %v386 = vpack.c.b16 %v329, %v328
    %v387 = vpack.c.b16 %v331, %v330
    %v388 = vpack.c.b16 %v333, %v332
    %v389 = vpack.c.b16 %v335, %v334
    %v390 = vpack.c.b16 %v337, %v336
    %v391 = vpack.c.b16 %v339, %v338
    %v392 = vpack.c.b16 %v341, %v340
    %v393 = vpack.c.b16 %v343, %v342
    %v394 = vpack.c.b16 %v345, %v344
    %v395 = vpack.c.b16 %v347, %v346
    %444 = vmatpush.bf16.msra.mxu0 %v355
    %445 = vmatpush.bf16.msra.mxu0 %v354
    %446 = vmatpush.bf16.msra.mxu0 %v353
    %447 = vmatpush.bf16.msra.mxu0 %v352
    %448 = vmatpush.bf16.msra.mxu0 %v351
    %449 = vmatpush.bf16.msra.mxu0 %v350
    %450 = vmatpush.bf16.msra.mxu0 %v349
    %451 = vmatpush.bf16.msra.mxu0 %v348
    %452 = vmatmul.bf16.gmra.mxu0 %v144
    %v453 = vpop.f32.mrf.mxu0
    %v454 = vadd.f32 %v125, %v453
    %v455 = vpop.f32.mrf.mxu0
    %v456 = vadd.f32 %v125, %v455
    %457 = vdwg.mxu0
    %458 = vmatpush.bf16.msra.mxu0 %v363
    %459 = vmatpush.bf16.msra.mxu0 %v362
    %460 = vmatpush.bf16.msra.mxu0 %v361
    %461 = vmatpush.bf16.msra.mxu0 %v360
    %462 = vmatpush.bf16.msra.mxu0 %v359
    %463 = vmatpush.bf16.msra.mxu0 %v358
    %464 = vmatpush.bf16.msra.mxu0 %v357
    %465 = vmatpush.bf16.msra.mxu0 %v356
    %466 = vmatmul.bf16.gmra.mxu0 %v145
    %v467 = vpop.f32.mrf.mxu0
    %v468 = vadd.f32 %v454, %v467
    %v469 = vpop.f32.mrf.mxu0
    %v470 = vadd.f32 %v456, %v469
    %471 = vdwg.mxu0
    %472 = vmatpush.bf16.msra.mxu0 %v371
    %473 = vmatpush.bf16.msra.mxu0 %v370
    %474 = vmatpush.bf16.msra.mxu0 %v369
    %475 = vmatpush.bf16.msra.mxu0 %v368
    %476 = vmatpush.bf16.msra.mxu0 %v367
    %477 = vmatpush.bf16.msra.mxu0 %v366
    %478 = vmatpush.bf16.msra.mxu0 %v365
    %479 = vmatpush.bf16.msra.mxu0 %v364
    %480 = vmatmul.bf16.gmra.mxu0 %v146
    %v481 = vpop.f32.mrf.mxu0
    %v482 = vadd.f32 %v468, %v481
    %v483 = vpop.f32.mrf.mxu0
    %v484 = vadd.f32 %v470, %v483
    %485 = vdwg.mxu0
    %486 = vmatpush.bf16.msra.mxu0 %v379
    %487 = vmatpush.bf16.msra.mxu0 %v378
    %488 = vmatpush.bf16.msra.mxu0 %v377
    %489 = vmatpush.bf16.msra.mxu0 %v376
    %490 = vmatpush.bf16.msra.mxu0 %v375
    %491 = vmatpush.bf16.msra.mxu0 %v374
    %492 = vmatpush.bf16.msra.mxu0 %v373
    %493 = vmatpush.bf16.msra.mxu0 %v372
    %494 = vmatmul.bf16.gmra.mxu0 %v147
    %v495 = vpop.f32.mrf.mxu0
    %v496 = vadd.f32 %v482, %v495
    %v497 = vpop.f32.mrf.mxu0
    %v498 = vadd.f32 %v484, %v497
    %499 = vdwg.mxu0
    %500 = vmatpush.bf16.msra.mxu0 %v387
    %501 = vmatpush.bf16.msra.mxu0 %v386
    %502 = vmatpush.bf16.msra.mxu0 %v385
    %503 = vmatpush.bf16.msra.mxu0 %v384
    %504 = vmatpush.bf16.msra.mxu0 %v383
    %505 = vmatpush.bf16.msra.mxu0 %v382
    %506 = vmatpush.bf16.msra.mxu0 %v381
    %507 = vmatpush.bf16.msra.mxu0 %v380
    %508 = vmatmul.bf16.gmra.mxu0 %v148
    %v509 = vpop.f32.mrf.mxu0
    %v510 = vadd.f32 %v496, %v509
    %v511 = vpop.f32.mrf.mxu0
    %v512 = vadd.f32 %v498, %v511
    %513 = vdwg.mxu0
    %514 = vmatpush.bf16.msra.mxu0 %v395
    %515 = vmatpush.bf16.msra.mxu0 %v394
    %516 = vmatpush.bf16.msra.mxu0 %v393
    %517 = vmatpush.bf16.msra.mxu0 %v392
    %518 = vmatpush.bf16.msra.mxu0 %v391
    %519 = vmatpush.bf16.msra.mxu0 %v390
    %520 = vmatpush.bf16.msra.mxu0 %v389
    %521 = vmatpush.bf16.msra.mxu0 %v388
    %522 = vmatmul.bf16.gmra.mxu0 %v149
    %v523 = vpop.f32.mrf.mxu0
    %v524 = vadd.f32 %v510, %v523
    %v525 = vpop.f32.mrf.mxu0
    %v526 = vadd.f32 %v512, %v525
    %527 = vdwg.mxu0
    %v528 = vmax.f32 %v524, 0.0
    %v529 = vmax.f32 %v526, 0.0
    %v530 = vpack.c.bf16 %v529, %v528
    %v531 = vld [vmem:[%s2] sm:$0xf]
    %v532 = vld [vmem:[%s2 + $0x4] sm:$0xf]
    %v533 = vld [vmem:[%s2 + $0x8] sm:$0xf]
    %v534 = vld [vmem:[%s2 + $0xc] sm:$0xf]
    %v535 = vld [vmem:[%s4 + $0x1] sm:$0x1]
    %v536 = vperm.slane %v535, 0
    %v541 = vunpack.c.l.b16 %v531
    %v542 = vunpack.c.l.b16 %v532
    %v543 = vunpack.c.l.b16 %v533
    %v544 = vunpack.c.l.b16 %v534
    %v545 = vpack.c.b16 %v542, %v541
    %v546 = vpack.c.b16 %v544, %v543
    %vm549 = vcmask 261120
    %v551 = vsel %vm549, %v530, 0
    %553 = vmatpush.bf16.msra.mxu0 0
    %554 = vmatpush.bf16.msra.mxu0 0
    %555 = vmatpush.bf16.msra.mxu0 0
    %556 = vmatpush.bf16.msra.mxu0 0
    %557 = vmatpush.bf16.msra.mxu0 0
    %558 = vmatpush.bf16.msra.mxu0 0
    %559 = vmatpush.bf16.msra.mxu0 %v546
    %560 = vmatpush.bf16.msra.mxu0 %v545
    %561 = vmatmul.bf16.gmra.mxu0 %v551
    %v562 = vpop.f32.mrf.mxu0
    %v563 = vadd.f32 %v536, %v562
    %v564 = vpop.f32.mrf.mxu0
    %v565 = vadd.f32 %v536, %v564
    %566 = vdwg.mxu0
    %v567 = vmax.f32 %v563, 0.0
    %v568 = vmax.f32 %v565, 0.0
    %v569 = vpack.c.bf16 %v568, %v567
    %s570 = scalar_lea.vmem %s2, 16
    %v571 = vld [vmem:[%s570] sm:$0xf]
    %v572 = vld [vmem:[%s570 + $0x4] sm:$0xf]
    %v573 = vld [vmem:[%s570 + $0x8] sm:$0xf]
    %v574 = vld [vmem:[%s570 + $0xc] sm:$0xf]
    %v575 = vld [vmem:[%s4 + $0x2] sm:$0x1]
    %v576 = vperm.slane %v575, 0
    %v581 = vunpack.c.l.b16 %v571
    %v582 = vunpack.c.l.b16 %v572
    %v583 = vunpack.c.l.b16 %v573
    %v584 = vunpack.c.l.b16 %v574
    %v585 = vpack.c.b16 %v582, %v581
    %v586 = vpack.c.b16 %v584, %v583
    %v590 = vsel %vm549, %v569, 0
    %592 = vmatpush.bf16.msra.mxu0 0
    %593 = vmatpush.bf16.msra.mxu0 0
    %594 = vmatpush.bf16.msra.mxu0 0
    %595 = vmatpush.bf16.msra.mxu0 0
    %596 = vmatpush.bf16.msra.mxu0 0
    %597 = vmatpush.bf16.msra.mxu0 0
    %598 = vmatpush.bf16.msra.mxu0 %v586
    %599 = vmatpush.bf16.msra.mxu0 %v585
    %600 = vmatmul.bf16.gmra.mxu0 %v590
    %v601 = vpop.f32.mrf.mxu0
    %v602 = vadd.f32 %v576, %v601
    %v603 = vpop.f32.mrf.mxu0
    %v604 = vadd.f32 %v576, %v603
    %605 = vdwg.mxu0
    %v606 = vmax.f32 %v602, 0.0
    %v607 = vmax.f32 %v604, 0.0
    %v608 = vpack.c.bf16 %v607, %v606
    %s609 = scalar_lea.vmem %s2, 32
    %v610 = vld [vmem:[%s609] sm:$0xf]
    %v611 = vld [vmem:[%s609 + $0x4] sm:$0xf]
    %v612 = vld [vmem:[%s609 + $0x8] sm:$0xf]
    %v613 = vld [vmem:[%s609 + $0xc] sm:$0xf]
    %v614 = vld [vmem:[%s4 + $0x3] sm:$0x1]
    %v615 = vperm.slane %v614, 0
    %v620 = vunpack.c.l.b16 %v610
    %v621 = vunpack.c.l.b16 %v611
    %v622 = vunpack.c.l.b16 %v612
    %v623 = vunpack.c.l.b16 %v613
    %v624 = vpack.c.b16 %v621, %v620
    %v625 = vpack.c.b16 %v623, %v622
    %v629 = vsel %vm549, %v608, 0
    %631 = vmatpush.bf16.msra.mxu0 0
    %632 = vmatpush.bf16.msra.mxu0 0
    %633 = vmatpush.bf16.msra.mxu0 0
    %634 = vmatpush.bf16.msra.mxu0 0
    %635 = vmatpush.bf16.msra.mxu0 0
    %636 = vmatpush.bf16.msra.mxu0 0
    %637 = vmatpush.bf16.msra.mxu0 %v625
    %638 = vmatpush.bf16.msra.mxu0 %v624
    %639 = vmatmul.bf16.gmra.mxu0 %v629
    %v640 = vpop.f32.mrf.mxu0
    %v641 = vadd.f32 %v615, %v640
    %v642 = vpop.f32.mrf.mxu0
    %v643 = vadd.f32 %v615, %v642
    %644 = vdwg.mxu0
    %v645 = vmax.f32 %v641, 0.0
    %v646 = vmax.f32 %v643, 0.0
    %v647 = vpack.c.bf16 %v646, %v645
    %v648 = vld [vmem:[%s3] sm:$0xf]
    %v649 = vld [vmem:[%s3 + $0x4] sm:$0xf]
    %v650 = vld [vmem:[%s3 + $0x8] sm:$0xf]
    %v651 = vld [vmem:[%s3 + $0xc] sm:$0xf]
    %v652 = vld [vmem:[%s4 + $0x4] sm:$0x1]
    %v653 = vperm.slane %v652, 0
    %v658 = vunpack.c.l.b16 %v648
    %v659 = vunpack.c.l.b16 %v649
    %v660 = vunpack.c.l.b16 %v650
    %v661 = vunpack.c.l.b16 %v651
    %v662 = vpack.c.b16 %v659, %v658
    %v663 = vpack.c.b16 %v661, %v660
    %v667 = vsel %vm549, %v647, 0
    %669 = vmatpush.bf16.msra.mxu0 0
    %670 = vmatpush.bf16.msra.mxu0 0
    %671 = vmatpush.bf16.msra.mxu0 0
    %672 = vmatpush.bf16.msra.mxu0 0
    %673 = vmatpush.bf16.msra.mxu0 0
    %674 = vmatpush.bf16.msra.mxu0 0
    %675 = vmatpush.bf16.msra.mxu0 %v663
    %676 = vmatpush.bf16.msra.mxu0 %v662
    %677 = vmatmul.bf16.gmra.mxu0 %v667
    %v678 = vpop.f32.mrf.mxu0
    %v679 = vadd.f32 %v653, %v678
    %v680 = vpop.f32.mrf.mxu0
    %v681 = vadd.f32 %v653, %v680
    %682 = vdwg.mxu0
    %683 = vst [vmem:[#allocation2] sm:$0xff] %v679
    %684 = vst [vmem:[#allocation2 + $0x8] sm:$0xff] %v681
    // Predicated region
    $region22: #{tpu_custom_call.1} parent=1 // pred_check
      _
    $region23: #{tpu_custom_call.1} parent=1 // pred_check_branch
      %686 = sbr.rel (0) target = $region25
    $region24: #{tpu_custom_call.1} parent=1 // pred_region
      %688 = vsyncadd [#allocation3], 0
      %s689 = sshll.u32 [#allocation2], 4
      %s690 = int_to_ptr.vmem [resolvable:$true] %s689
      %s691 = sshll.u32 %s5, 4
      %s692 = int_to_ptr.hbm [resolvable:$true] %s691
      %697 = dma.vmem_to_hbm [thread:$0]  %s690, 256, %s692, [#allocation3], 128, 128, 8
    $region25: #{tpu_custom_call.1} parent=1 // pred_fallthru
      _
    // Predicated region
    $region26: #{tpu_custom_call.1} parent=1 // pred_check
      _
    $region27: #{tpu_custom_call.1} parent=1 // pred_check_branch
      %699 = sbr.rel (0) target = $region29
    $region28: #{tpu_custom_call.1} parent=1 // pred_region
      %701 = dma.done [#allocation3], 256
    $region29: #{tpu_custom_call.1} parent=1 // pred_fallthru
      _
    %702 = vsyncpa [#allocation3], 1

</llo_original>
